<compile_context>
chip_gen: v5e
topology: v5e:2x2
jax: 0.10.0
libtpu: 0.0.40
codegen_flags: <defaults>
</compile_context>

<pallas_src>
import jax
import jax.numpy as jnp
from jax.experimental import pallas as pl
from jax.experimental.pallas import tpu as pltpu


def _ganloss_kernel(prob_ref, target_ref, reward_ref, out_ref, sel_acc):
    ci = pl.program_id(1)                      # C-tile index (reduction axis)

    @pl.when(ci == 0)
    def _():
        sel_acc[...] = jnp.zeros_like(sel_acc)

    prob = prob_ref[...]                       # (TN, TC) f32 log-probs
    tgt = target_ref[...]                      # (TN, 1)  i32
    tn, tc = prob.shape

    # One-hot select of the target column within this C-tile (class iota offset by the
    # C-tile index). Exactly one C-tile contributes a nonzero value per row, so summing
    # the masked log-probs across C tiles recovers prob[i, target[i]] exactly.
    col = jax.lax.broadcasted_iota(jnp.int32, (tn, tc), 1) + ci * tc
    one_hot = col == tgt                       # (TN, TC) bool
    sel_acc[...] += jnp.sum(jnp.where(one_hot, prob, 0.0), axis=1, keepdims=True)

    @pl.when(ci == pl.num_programs(1) - 1)
    def _():
        # exp() on only TN values (post-selection), not the full (TN, TC) tile.
        out_ref[...] = (1.0 - jnp.exp(sel_acc[...])) * reward_ref[...]


def _pick_tile(dim, cap, align):
    """Largest tile <= cap that divides dim and is a multiple of `align`;
    falls back to the full dim (a full-extent block is always legal)."""
    if dim <= cap:
        return dim
    t = (cap // align) * align
    while t >= align:
        if dim % t == 0:
            return t
        t -= align
    return dim


def gan_loss(prob, target, reward, *, tn_cap=256, tc_cap=1024):
    """prob: (N, C) f32 log-probs, target: (N,) int, reward: (N,) f32 -> scalar f32."""
    n, c = prob.shape
    tn = _pick_tile(n, tn_cap, 8)     # sublane-aligned N tile
    tc = _pick_tile(c, tc_cap, 128)   # lane-aligned C tile

    target2d = target.reshape(n, 1).astype(jnp.int32)
    reward2d = reward.reshape(n, 1).astype(jnp.float32)

    per_row = pl.pallas_call(
        _ganloss_kernel,
        out_shape=jax.ShapeDtypeStruct((n, 1), jnp.float32),
        grid_spec=pltpu.PrefetchScalarGridSpec(
            num_scalar_prefetch=0,
            grid=(n // tn, c // tc),
            in_specs=[
                pl.BlockSpec((tn, tc), lambda i, j: (i, j)),   # prob stream (double-buffered)
                pl.BlockSpec((tn, 1), lambda i, j: (i, 0)),    # target (resident per N-chunk)
                pl.BlockSpec((tn, 1), lambda i, j: (i, 0)),    # reward (resident per N-chunk)
            ],
            out_specs=pl.BlockSpec((tn, 1), lambda i, j: (i, 0)),
            scratch_shapes=[pltpu.VMEM((tn, 1), jnp.float32)],
        ),
        compiler_params=pltpu.CompilerParams(
            dimension_semantics=("parallel", "arbitrary")),
        cost_estimate=pl.CostEstimate(
            flops=3 * n * c,                 # compare + select + accumulate
            transcendentals=n,               # one exp per row, post-selection
            bytes_accessed=4 * n * c + 4 * n + 4 * n + 4 * n),
    )(prob.astype(jnp.float32), target2d, reward2d)

    # torch.mean over the N per-sample losses, with the GLOBAL N.
    return jnp.mean(per_row)


if __name__ == "__main__":
    key = jax.random.PRNGKey(0)

    def run_case(k, n, c):
        k1, k2, k3 = jax.random.split(k, 3)
        logits = jax.random.normal(k1, (n, c), dtype=jnp.float32)
        prob = jax.nn.log_softmax(logits, axis=-1)       # generator log-probs
        target = jax.random.randint(k2, (n,), 0, c, dtype=jnp.int32)
        reward = jax.random.uniform(k3, (n,), dtype=jnp.float32)

        loss = gan_loss(prob, target, reward)
        jax.block_until_ready(loss)

        ref = jnp.mean((1.0 - jnp.exp(prob[jnp.arange(n), target])) * reward)
        assert jnp.allclose(loss, ref, atol=1e-5), (n, c, loss, ref)
        return loss

    # Small shape matching the module's toy usage (batch of sampled tokens x vocab).
    run_case(jax.random.fold_in(key, 0), 8, 32)          # single-tile path, grid (1, 1)
    # Tiled / accumulated path: (256, 1024) prob tiles, grid (2, 1), parallel N axis.
    run_case(jax.random.fold_in(key, 1), 512, 1024)

    print("KERNEL_OK")
</pallas_src>

<mosaic_0001>
module attributes {stable_mosaic.version = 11 : i64} {
  func.func @_ganloss_kernel(%arg0: i32, %arg1: i32, %arg2: memref<8x32xf32, #tpu.memory_space<vmem>>, %arg3: memref<8x1xi32, #tpu.memory_space<vmem>>, %arg4: memref<8x1xf32, #tpu.memory_space<vmem>>, %arg5: memref<8x1xf32, #tpu.memory_space<vmem>>, %arg6: memref<8x1xf32, #tpu.memory_space<vmem>>) attributes {dimension_semantics = [#tpu.dimension_semantics<parallel>, #tpu.dimension_semantics<arbitrary>], iteration_bounds = array<i64: 1, 1>, scalar_prefetch = 0 : i64, scratch_operands = 1 : i64, tpu.core_type = #tpu.core_type<tc>, window_params = [{transform_indices = @transform_0, window_bounds = array<i64: 8, 32>}, {transform_indices = @transform_1, window_bounds = array<i64: 8, 1>}, {transform_indices = @transform_2, window_bounds = array<i64: 8, 1>}, {transform_indices = @transform_3, window_bounds = array<i64: 8, 1>}]} {
    %c0_i32 = arith.constant 0 : i32
    %0 = arith.cmpi eq, %arg1, %c0_i32 : i32
    %1 = arith.extui %0 : i1 to i32
    %c0_i32_0 = arith.constant 0 : i32
    %2 = arith.cmpi ne, %1, %c0_i32_0 : i32
    scf.if %2 {
      %cst_11 = arith.constant 0.000000e+00 : f32
      %21 = vector.broadcast %cst_11 : f32 to vector<8x1xf32>
      %c0_12 = arith.constant 0 : index
      %c0_13 = arith.constant 0 : index
      %22 = vector.load %arg6[%c0_12, %c0_13] : memref<8x1xf32, #tpu.memory_space<vmem>>, vector<8x1xf32>
      tpu.vector_store %arg6[%c0_12, %c0_13], %21 {strides = array<i32>} : memref<8x1xf32, #tpu.memory_space<vmem>>, vector<8x1xf32>,
    } else {
    }
    %c0 = arith.constant 0 : index
    %c0_1 = arith.constant 0 : index
    %3 = vector.load %arg2[%c0, %c0_1] : memref<8x32xf32, #tpu.memory_space<vmem>>, vector<8x32xf32>
    %c0_2 = arith.constant 0 : index
    %c0_3 = arith.constant 0 : index
    %4 = vector.load %arg3[%c0_2, %c0_3] : memref<8x1xi32, #tpu.memory_space<vmem>>, vector<8x1xi32>
    %5 = tpu.iota {dimensions = array<i32: 1>} : vector<8x32xi32>
    %c32_i32 = arith.constant 32 : i32
    %6 = arith.muli %arg1, %c32_i32 : i32
    %7 = vector.broadcast %6 : i32 to vector<8x32xi32>
    %8 = arith.addi %5, %7 : vector<8x32xi32>
    %9 = vector.broadcast %4 : vector<8x1xi32> to vector<8x32xi32>
    %10 = arith.cmpi eq, %8, %9 : vector<8x32xi32>
    %c0_4 = arith.constant 0 : index
    %c0_5 = arith.constant 0 : index
    %11 = vector.load %arg6[%c0_4, %c0_5] : memref<8x1xf32, #tpu.memory_space<vmem>>, vector<8x1xf32>
    %cst = arith.constant 0.000000e+00 : f32
    %12 = vector.broadcast %cst : f32 to vector<8x32xf32>
    %13 = arith.select %10, %3, %12 : vector<8x32xi1>, vector<8x32xf32>
    %cst_6 = arith.constant dense<0.000000e+00> : vector<8xf32>
    %14 = vector.multi_reduction <add>, %13, %cst_6 [1] : vector<8x32xf32> to vector<8xf32>
    %15 = vector.shape_cast %14 : vector<8xf32> to vector<8x1xf32>
    %16 = arith.addf %11, %15 : vector<8x1xf32>
    %c0_7 = arith.constant 0 : index
    %c0_8 = arith.constant 0 : index
    %17 = vector.load %arg6[%c0_7, %c0_8] : memref<8x1xf32, #tpu.memory_space<vmem>>, vector<8x1xf32>
    tpu.vector_store %arg6[%c0_7, %c0_8], %16 {strides = array<i32>} : memref<8x1xf32, #tpu.memory_space<vmem>>, vector<8x1xf32>,
    %c0_i32_9 = arith.constant 0 : i32
    %18 = arith.cmpi eq, %arg1, %c0_i32_9 : i32
    %19 = arith.extui %18 : i1 to i32
    %c0_i32_10 = arith.constant 0 : i32
    %20 = arith.cmpi ne, %19, %c0_i32_10 : i32
    scf.if %20 {
      %c0_11 = arith.constant 0 : index
      %c0_12 = arith.constant 0 : index
      %21 = vector.load %arg6[%c0_11, %c0_12] : memref<8x1xf32, #tpu.memory_space<vmem>>, vector<8x1xf32>
      %22 = math.exp %21 : vector<8x1xf32>
      %cst_13 = arith.constant 1.000000e+00 : f32
      %23 = vector.broadcast %cst_13 : f32 to vector<8x1xf32>
      %24 = arith.subf %23, %22 : vector<8x1xf32>
      %c0_14 = arith.constant 0 : index
      %c0_15 = arith.constant 0 : index
      %25 = vector.load %arg4[%c0_14, %c0_15] : memref<8x1xf32, #tpu.memory_space<vmem>>, vector<8x1xf32>
      %26 = arith.mulf %24, %25 : vector<8x1xf32>
      %c0_16 = arith.constant 0 : index
      %c0_17 = arith.constant 0 : index
      %27 = vector.load %arg5[%c0_16, %c0_17] : memref<8x1xf32, #tpu.memory_space<vmem>>, vector<8x1xf32>
      tpu.vector_store %arg5[%c0_16, %c0_17], %26 {strides = array<i32>} : memref<8x1xf32, #tpu.memory_space<vmem>>, vector<8x1xf32>,
    } else {
    }
    return
  }
  func.func @transform_0(%arg0: i32, %arg1: i32) -> (i32, i32) {
    %c0_i32 = arith.constant 0 : i32
    return %arg0, %arg1 : i32, i32
  }
  func.func @transform_1(%arg0: i32, %arg1: i32) -> (i32, i32) {
    %c0_i32 = arith.constant 0 : i32
    %c0_i32_0 = arith.constant 0 : i32
    return %arg0, %c0_i32 : i32, i32
  }
  func.func @transform_2(%arg0: i32, %arg1: i32) -> (i32, i32) {
    %c0_i32 = arith.constant 0 : i32
    %c0_i32_0 = arith.constant 0 : i32
    return %arg0, %c0_i32 : i32, i32
  }
  func.func @transform_3(%arg0: i32, %arg1: i32) -> (i32, i32) {
    %c0_i32 = arith.constant 0 : i32
    %c0_i32_0 = arith.constant 0 : i32
    return %arg0, %c0_i32 : i32, i32
  }
}

</mosaic_0001>

<llo_original>
// kernel: tpu_custom_call.1
$region0: #{tpu_custom_call.1}
  #allocation0 [shape = 'u32[]', space=smem, size = 0x4, offset = 0x4, fixed_abs, tag = 'smem constant byte address 0x4 - core index']
  #allocation1 [shape = 'u32[72,128]{1,0:T(1,128)}', space=vmem, size = 0x9000, scoped, tag = 'internal scratch']
  #allocation2 [shape = 'f32[8,1]{1,0:T(8,128)}', space=vmem, size = 0x1000, scoped, tag = 'scratch operand']
  %s0 = inlined_call_operand.vmem [shape: f32[8,32], index: 0, kind: input, shape index: {}]
  %s1 = inlined_call_operand.vmem [shape: s32[8,1], index: 1, kind: input, shape index: {}]
  %s2 = inlined_call_operand.vmem [shape: f32[8,1], index: 2, kind: input, shape index: {}]
  %s3 = inlined_call_operand.vmem [shape: f32[8,1], index: 3, kind: output, shape index: {}]
  %s4 = sld [smem:[#allocation0]]
  $region30: #{tpu_custom_call.1} parent=0
    _
  %s6 = ssub.s32 1, %s4
  %s7 = scalar_select 0, %s6, %s4
  // Predicated region
  $region2: #{tpu_custom_call.1} parent=0 // pred_check
    _
  $region3: #{tpu_custom_call.1} parent=0 // pred_check_branch
    %9 = sbr.rel (0) target = $region5
  $region4: #{tpu_custom_call.1} parent=0 // pred_region
    _
  $region5: #{tpu_custom_call.1} parent=0 // pred_fallthru
    _
  // Predicated region
  $region6: #{tpu_custom_call.1} parent=0 // pred_check
    _
  $region7: #{tpu_custom_call.1} parent=0 // pred_check_branch
    %11 = sbr.rel (0) target = $region9
  $region8: #{tpu_custom_call.1} parent=0 // pred_region
    _
  $region9: #{tpu_custom_call.1} parent=0 // pred_fallthru
    _
  // Predicated region
  $region10: #{tpu_custom_call.1} parent=0 // pred_check
    _
  $region11: #{tpu_custom_call.1} parent=0 // pred_check_branch
    %13 = sbr.rel (0) target = $region13
  $region12: #{tpu_custom_call.1} parent=0 // pred_region
    _
  $region13: #{tpu_custom_call.1} parent=0 // pred_fallthru
    _
  %p14 = scmp.eq.s32.totalorder 0, 0
  // Predicated region
  $region14: #{tpu_custom_call.1} parent=0 // pred_check
    %p15 = pneg %p14
  $region15: #{tpu_custom_call.1} parent=0 // pred_check_branch
    %17 = sbr.rel (%p15) target = $region17
  $region16: #{tpu_custom_call.1} parent=0 // pred_region
    %vm18 = vcmask 7168
    %19 = vst.msk [vmem:[#allocation2] sm:$0xff] %vm18, 0.0
  $region17: #{tpu_custom_call.1} parent=0 // pred_fallthru
    _
  %v20 = vld [vmem:[%s0] sm:$0xff]
  %v21 = vld [vmem:[%s1] sm:$0xff]
  %v22 = vlaneseq
  %v23 = vand.u32 %v22, 127
  %s24 = smul.u32 0, 32
  %v25 = vstv %s24
  %v26 = vadd.s32 %v23, %v25
  %27 = vset.pattern.permute.xlu0 0
  %28 = vperm.xlu0 %27, %v21
  %v29 = vpop.permute.xlu0 %28
  %vm30 = vcmp.eq.s32.totalorder %v26, %v29
  %v31 = vld [vmem:[#allocation2] sm:$0xff]
  %v32 = vsel %vm30, %v20, 0.0
  %vm33 = vcmask 261120
  %v34 = vsel %vm33, %v32, 0.0
  %35 = vadd.xlane.f32.xlu0 %v34
  %v36 = vpop.xlane.xlu0 %35
  %v37 = vadd.f32 %v31, %v36
  %vm38 = vcmask 7168
  %39 = vst.msk [vmem:[#allocation2] sm:$0xff] %vm38, %v37
  // Predicated region
  $region18: #{tpu_custom_call.1} parent=0 // pred_check
    %p40 = pneg %p14
  $region19: #{tpu_custom_call.1} parent=0 // pred_check_branch
    %42 = sbr.rel (%p40) target = $region21
  $region20: #{tpu_custom_call.1} parent=0 // pred_region
    %v43 = vld [vmem:[#allocation2] sm:$0xff]
    %v44 = vmul.f32 %v43, 1.442695
    %v45 = vpow.pop %v44
    %v46 = vsub.f32 1.0, %v45
    %v47 = vld [vmem:[%s2] sm:$0xff]
    %v48 = vmul.f32 %v46, %v47
    %49 = vst.msk [vmem:[%s3] sm:$0xff] %vm38, %v48
  $region21: #{tpu_custom_call.1} parent=0 // pred_fallthru
    _
  // Predicated region
  $region22: #{tpu_custom_call.1} parent=0 // pred_check
    _
  $region23: #{tpu_custom_call.1} parent=0 // pred_check_branch
    %51 = sbr.rel (0) target = $region25
  $region24: #{tpu_custom_call.1} parent=0 // pred_region
    _
  $region25: #{tpu_custom_call.1} parent=0 // pred_fallthru
    _
  // Predicated region
  $region26: #{tpu_custom_call.1} parent=0 // pred_check
    _
  $region27: #{tpu_custom_call.1} parent=0 // pred_check_branch
    %53 = sbr.rel (0) target = $region29
  $region28: #{tpu_custom_call.1} parent=0 // pred_region
    _
  $region29: #{tpu_custom_call.1} parent=0 // pred_fallthru
    _

</llo_original>
